<compile_context>
chip_gen: v6e
topology: v6e:2x2x1
jax: 0.10.0
libtpu: 0.0.40
codegen_flags: <defaults>
</compile_context>

<pallas_src>
import jax
import jax.numpy as jnp
from jax.experimental import pallas as pl
from jax.experimental.pallas import tpu as pltpu


def _round_up(a, b):
    return (a + b - 1) // b * b


def _patch_embed_kernel(x_ref, w_ref, b_ref, o_ref):
    # x_ref: (tm, K)   row tile of flattened patches
    # w_ref: (K, Dp)   conv weight as (in, out), out padded to a 128 multiple
    # b_ref: (1, Dp)   bias (padded)
    # o_ref: (tm, Dp)  lane-dense output tile
    acc = jnp.dot(x_ref[...], w_ref[...], preferred_element_type=jnp.float32)
    o_ref[...] = (acc + b_ref[...].astype(jnp.float32)).astype(o_ref.dtype)


def patch_embed_pallas(x, weight, bias, *, patch_size=4, tm=256):
    """x: (B, C, H, W); weight: (D, C, p, p) torch conv layout; bias: (D,).

    Returns (tokens (B, N, D), Hp, Wp), matching PatchEmbed.forward
    (norm_layer=None -> Identity).
    """
    p = patch_size
    B, C, H, W = x.shape
    D = weight.shape[0]

    # 1) zero-pad H, W up to a multiple of the patch size (like F.pad).
    pad_h = (-H) % p
    pad_w = (-W) % p
    if pad_h or pad_w:
        x = jnp.pad(x, ((0, 0), (0, 0), (0, pad_h), (0, pad_w)))
    Hp, Wp = (H + pad_h) // p, (W + pad_w) // p
    N = Hp * Wp
    M = B * N
    K = C * p * p

    # 2) patchify: (B, C, Hp, p, Wp, p) -> (B, Hp, Wp, C, p, p) -> (M, K).
    #    Flatten order (c, kh, kw) matches the conv-weight flatten order below.
    xm = x.reshape(B, C, Hp, p, Wp, p).transpose(0, 2, 4, 1, 3, 5).reshape(M, K)

    # 3) conv weight -> (K, Dp) matmul weight; pad the output lane dim to a
    #    multiple of 128 so the kernel's stores are unmasked (lane-dense).
    Dp = _round_up(D, 128)
    wk = weight.reshape(D, K).T                       # (K, D)
    wk = jnp.pad(wk, ((0, 0), (0, Dp - D)))
    bk = jnp.pad(bias, (0, Dp - D)).reshape(1, Dp)

    # 4) real row tile (multiple of 8 sublanes) so the grid has many steps and
    #    the BlockSpec pipeline overlaps x-tile DMA with MXU work; tail rows
    #    are zero-padded instead of asserting M % tm == 0.
    tm_eff = min(tm, _round_up(M, 8))
    Mp = _round_up(M, tm_eff)
    if Mp != M:
        xm = jnp.pad(xm, ((0, Mp - M), (0, 0)))

    out = pl.pallas_call(
        _patch_embed_kernel,
        out_shape=jax.ShapeDtypeStruct((Mp, Dp), x.dtype),
        grid_spec=pltpu.PrefetchScalarGridSpec(
            num_scalar_prefetch=0,
            grid=(Mp // tm_eff,),
            in_specs=[
                pl.BlockSpec((tm_eff, K), lambda i: (i, 0)),   # streamed rows
                pl.BlockSpec((K, Dp), lambda i: (0, 0)),        # resident weight
                pl.BlockSpec((1, Dp), lambda i: (0, 0)),        # resident bias
            ],
            out_specs=pl.BlockSpec((tm_eff, Dp), lambda i: (i, 0)),
        ),
        compiler_params=pltpu.CompilerParams(
            dimension_semantics=("parallel",)),   # megacore-shardable on v7x
    )(xm, wk, bk)

    tokens = out[:M, :D].reshape(B, N, D)
    # self.norm is nn.Identity() when norm_layer is None.
    return tokens, Hp, Wp


def patch_embed_reference(x, weight, bias, *, patch_size=4):
    p = patch_size
    _, _, H, W = x.shape
    pad_h = (-H) % p
    pad_w = (-W) % p
    if pad_h or pad_w:
        x = jnp.pad(x, ((0, 0), (0, 0), (0, pad_h), (0, pad_w)))
    y = jax.lax.conv_general_dilated(
        x, weight, window_strides=(p, p), padding="VALID",
        dimension_numbers=("NCHW", "OIHW", "NCHW"),
        precision=jax.lax.Precision.HIGHEST)
    y = y + bias[None, :, None, None]
    B, D, Hp, Wp = y.shape
    return y.reshape(B, D, Hp * Wp).transpose(0, 2, 1), Hp, Wp


if __name__ == "__main__":
    # PatchEmbed(patch_size=4, in_c=3, embed_dim=96, norm_layer=None)
    B, C, H, W = 2, 3, 18, 18          # 18 % 4 != 0 -> exercises the pad path
    patch_size, embed_dim = 4, 96

    key = jax.random.PRNGKey(0)
    kx, kw, kb = jax.random.split(key, 3)
    x = jax.random.normal(kx, (B, C, H, W), dtype=jnp.float32)
    weight = 0.1 * jax.random.normal(
        kw, (embed_dim, C, patch_size, patch_size), dtype=jnp.float32)
    bias = 0.1 * jax.random.normal(kb, (embed_dim,), dtype=jnp.float32)

    tokens, Hp, Wp = patch_embed_pallas(x, weight, bias, patch_size=patch_size)
    jax.block_until_ready(tokens)

    ref, Hr, Wr = patch_embed_reference(x, weight, bias, patch_size=patch_size)
    assert (Hp, Wp) == (Hr, Wr) == (5, 5)
    assert tokens.shape == (B, Hp * Wp, embed_dim)
    assert jnp.allclose(tokens, ref, atol=1e-4, rtol=1e-4)
    print("KERNEL_OK")
</pallas_src>

<mosaic_0001>
module attributes {stable_mosaic.version = 11 : i64} {
  func.func @_patch_embed_kernel(%arg0: i32, %arg1: memref<56x48xf32, #tpu.memory_space<vmem>>, %arg2: memref<48x128xf32, #tpu.memory_space<vmem>>, %arg3: memref<1x128xf32, #tpu.memory_space<vmem>>, %arg4: memref<56x128xf32, #tpu.memory_space<vmem>>) attributes {dimension_semantics = [#tpu.dimension_semantics<parallel>], iteration_bounds = array<i64: 1>, scalar_prefetch = 0 : i64, scratch_operands = 0 : i64, tpu.core_type = #tpu.core_type<tc>, window_params = [{transform_indices = @transform_0, window_bounds = array<i64: 56, 48>}, {pipeline_mode = #tpu.pipeline_mode<synchronous>, transform_indices = @transform_1, window_bounds = array<i64: 48, 128>}, {pipeline_mode = #tpu.pipeline_mode<synchronous>, transform_indices = @transform_2, window_bounds = array<i64: 1, 128>}, {transform_indices = @transform_3, window_bounds = array<i64: 56, 128>}]} {
    %c0 = arith.constant 0 : index
    %c0_0 = arith.constant 0 : index
    %0 = vector.load %arg1[%c0, %c0_0] : memref<56x48xf32, #tpu.memory_space<vmem>>, vector<56x48xf32>
    %c0_1 = arith.constant 0 : index
    %c0_2 = arith.constant 0 : index
    %1 = vector.load %arg2[%c0_1, %c0_2] : memref<48x128xf32, #tpu.memory_space<vmem>>, vector<48x128xf32>
    %cst = arith.constant dense<0.000000e+00> : vector<56x128xf32>
    %2 = tpu.matmul %0, %1, %cst {dimension_numbers = #tpu.dot_dimension_numbers<[1], [0], [0], [1], [0, 0, 1, 1], [], []>} : vector<56x48xf32>, vector<48x128xf32>, vector<56x128xf32> -> vector<56x128xf32>
    %c0_3 = arith.constant 0 : index
    %c0_4 = arith.constant 0 : index
    %3 = vector.load %arg3[%c0_3, %c0_4] : memref<1x128xf32, #tpu.memory_space<vmem>>, vector<1x128xf32>
    %4 = vector.broadcast %3 : vector<1x128xf32> to vector<56x128xf32>
    %5 = arith.addf %2, %4 : vector<56x128xf32>
    %c0_5 = arith.constant 0 : index
    %c0_6 = arith.constant 0 : index
    %6 = vector.load %arg4[%c0_5, %c0_6] : memref<56x128xf32, #tpu.memory_space<vmem>>, vector<56x128xf32>
    tpu.vector_store %arg4[%c0_5, %c0_6], %5 {strides = array<i32>} : memref<56x128xf32, #tpu.memory_space<vmem>>, vector<56x128xf32>,
    return
  }
  func.func @transform_0(%arg0: i32) -> (i32, i32) {
    %c0_i32 = arith.constant 0 : i32
    %c0_i32_0 = arith.constant 0 : i32
    return %arg0, %c0_i32 : i32, i32
  }
  func.func @transform_1(%arg0: i32) -> (i32, i32) {
    %c0_i32 = arith.constant 0 : i32
    %c0_i32_0 = arith.constant 0 : i32
    %c0_i32_1 = arith.constant 0 : i32
    return %c0_i32, %c0_i32_0 : i32, i32
  }
  func.func @transform_2(%arg0: i32) -> (i32, i32) {
    %c0_i32 = arith.constant 0 : i32
    %c0_i32_0 = arith.constant 0 : i32
    %c0_i32_1 = arith.constant 0 : i32
    return %c0_i32, %c0_i32_0 : i32, i32
  }
  func.func @transform_3(%arg0: i32) -> (i32, i32) {
    %c0_i32 = arith.constant 0 : i32
    %c0_i32_0 = arith.constant 0 : i32
    return %arg0, %c0_i32 : i32, i32
  }
}

</mosaic_0001>

<llo_original>
// kernel: tpu_custom_call.1
$region0: #{tpu_custom_call.1}
  #allocation0 [shape = 'u32[]', space=smem, size = 0x4, offset = 0x4, fixed_abs, tag = 'smem constant byte address 0x4 - core index']
  #allocation1 [shape = 'u32[144,128]{1,0:T(1,128)}', space=vmem, size = 0x12000, scoped, tag = 'internal scratch']
  %s0 = inlined_call_operand.vmem [shape: f32[56,48], index: 0, kind: input, shape index: {}]
  %s1 = inlined_call_operand.vmem [shape: f32[48,128], index: 1, kind: input, shape index: {}]
  %s2 = inlined_call_operand.vmem [shape: f32[1,128], index: 2, kind: input, shape index: {}]
  %s3 = inlined_call_operand.hbm [shape: f32[56,128], index: 3, kind: output, shape index: {}]
  %s4 = sld [smem:[#allocation0]]
  $region22: #{tpu_custom_call.1} parent=0
    _
  %s6 = ssub.s32 1, %s4
  %s7 = scalar_select 0, %s6, %s4
  $region1: #{tpu_custom_call.1} parent=0
    #allocation2 [shape = 'u8[28672]{0}', space=vmem, size = 0x7000, scoped, tag = 'output window, operand 0, single buffered']
    #allocation3 [shape = 's32[1]{0}', space=sflag, size = 0x4, scoped, tag = 'scoped memory for tpu_custom_call.1']
    %8 = vsyncpa [#allocation3], 0
    // Predicated region
    $region2: #{tpu_custom_call.1} parent=1 // pred_check
      _
    $region3: #{tpu_custom_call.1} parent=1 // pred_check_branch
      %10 = sbr.rel (0) target = $region5
    $region4: #{tpu_custom_call.1} parent=1 // pred_region
      _
    $region5: #{tpu_custom_call.1} parent=1 // pred_fallthru
      _
    // Predicated region
    $region6: #{tpu_custom_call.1} parent=1 // pred_check
      _
    $region7: #{tpu_custom_call.1} parent=1 // pred_check_branch
      %12 = sbr.rel (0) target = $region9
    $region8: #{tpu_custom_call.1} parent=1 // pred_region
      _
    $region9: #{tpu_custom_call.1} parent=1 // pred_fallthru
      _
    // Predicated region
    $region10: #{tpu_custom_call.1} parent=1 // pred_check
      _
    $region11: #{tpu_custom_call.1} parent=1 // pred_check_branch
      %14 = sbr.rel (0) target = $region13
    $region12: #{tpu_custom_call.1} parent=1 // pred_region
      _
    $region13: #{tpu_custom_call.1} parent=1 // pred_fallthru
      _
    %v15 = vld [vmem:[%s0] sm:$0xff]
    %v16 = vld [vmem:[%s0 + $0x8] sm:$0xff]
    %v17 = vld [vmem:[%s0 + $0x10] sm:$0xff]
    %v18 = vld [vmem:[%s0 + $0x18] sm:$0xff]
    %v19 = vld [vmem:[%s0 + $0x20] sm:$0xff]
    %v20 = vld [vmem:[%s0 + $0x28] sm:$0xff]
    %v21 = vld [vmem:[%s0 + $0x30] sm:$0xff]
    %v22 = vld [vmem:[%s1] sm:$0xff]
    %v23 = vld [vmem:[%s1 + $0x8] sm:$0xff]
    %v24 = vld [vmem:[%s1 + $0x10] sm:$0xff]
    %v25 = vld [vmem:[%s1 + $0x18] sm:$0xff]
    %v26 = vld [vmem:[%s1 + $0x20] sm:$0xff]
    %v27 = vld [vmem:[%s1 + $0x28] sm:$0xff]
    %v28 = vld [vmem:[%s2] sm:$0x1]
    %v30 = vlaneseq
    %v31 = vshrl.u32 %v30, 7
    %v32 = vsub.s32 0, %v31
    %v33 = vrot.slane %v28, %v32
    %vm35 = vcmask 392192
    %v37 = vsel %vm35, %v15, 0
    %v40 = vsel %vm35, %v16, 0
    %v43 = vsel %vm35, %v17, 0
    %v46 = vsel %vm35, %v18, 0
    %v49 = vsel %vm35, %v19, 0
    %v52 = vsel %vm35, %v20, 0
    %v55 = vsel %vm35, %v21, 0
    %57 = vmatprep.subr.mxu0 0.0
    %58 = vmatpush1.msra.mxu0 0.0
    %59 = vmatprep.subr.mxu0 0.0
    %60 = vmatpush1.msra.mxu0 0.0
    %61 = vmatprep.subr.mxu0 0.0
    %62 = vmatpush1.msra.mxu0 0.0
    %63 = vmatprep.subr.mxu0 0.0
    %64 = vmatpush1.msra.mxu0 0.0
    %65 = vmatprep.subr.mxu0 0.0
    %66 = vmatpush1.msra.mxu0 0.0
    %67 = vmatprep.subr.mxu0 0.0
    %68 = vmatpush1.msra.mxu0 0.0
    %69 = vmatprep.subr.mxu0 0.0
    %70 = vmatpush1.msra.mxu0 0.0
    %71 = vmatprep.subr.mxu0 0.0
    %72 = vmatpush1.msra.mxu0 0.0
    %73 = vmatprep.subr.mxu0 0.0
    %74 = vmatpush1.msra.mxu0 0.0
    %75 = vmatprep.subr.mxu0 0.0
    %76 = vmatpush1.msra.mxu0 0.0
    %77 = vmatprep.subr.mxu0 0.0
    %78 = vmatpush1.msra.mxu0 %v27
    %79 = vmatprep.subr.mxu0 0.0
    %80 = vmatpush1.msra.mxu0 %v26
    %81 = vmatprep.subr.mxu0 0.0
    %82 = vmatpush1.msra.mxu0 %v25
    %83 = vmatprep.subr.mxu0 0.0
    %84 = vmatpush1.msra.mxu0 %v24
    %85 = vmatprep.subr.mxu0 0.0
    %86 = vmatpush1.msra.mxu0 %v23
    %87 = vmatprep.subr.mxu0 0.0
    %88 = vmatpush1.msra.mxu0 %v22
    %89 = vmatprep.subr.mxu0 0.0
    %90 = vmatpush2.msra.mxu0 0.0
    %91 = vmatprep.subr.mxu0 0.0
    %92 = vmatpush2.msra.mxu0 0.0
    %93 = vmatprep.subr.mxu0 0.0
    %94 = vmatpush2.msra.mxu0 0.0
    %95 = vmatprep.subr.mxu0 0.0
    %96 = vmatpush2.msra.mxu0 0.0
    %97 = vmatprep.subr.mxu0 0.0
    %98 = vmatpush2.msra.mxu0 0.0
    %99 = vmatprep.subr.mxu0 0.0
    %100 = vmatpush2.msra.mxu0 0.0
    %101 = vmatprep.subr.mxu0 0.0
    %102 = vmatpush2.msra.mxu0 0.0
    %103 = vmatprep.subr.mxu0 0.0
    %104 = vmatpush2.msra.mxu0 0.0
    %105 = vmatprep.subr.mxu0 0.0
    %106 = vmatpush2.msra.mxu0 0.0
    %107 = vmatprep.subr.mxu0 0.0
    %108 = vmatpush2.msra.mxu0 0.0
    %109 = vmatprep.subr.mxu0 0.0
    %110 = vmatpush2.msra.mxu0 0.0
    %111 = vmatprep.subr.mxu0 0.0
    %112 = vmatpush2.msra.mxu0 0.0
    %113 = vmatprep.subr.mxu0 0.0
    %114 = vmatpush2.msra.mxu0 0.0
    %115 = vmatprep.subr.mxu0 0.0
    %116 = vmatpush2.msra.mxu0 0.0
    %117 = vmatprep.subr.mxu0 0.0
    %118 = vmatpush2.msra.mxu0 0.0
    %119 = vmatprep.subr.mxu0 0.0
    %120 = vmatpush2.msra.mxu0 0.0
    %121 = vmatprep.mubr.f32.mxu0 0.0
    %122 = vmatmul.mubr.f32.gmra.mxu0 %v37
    %v123 = vpop.f32.mrf.mxu0
    %v124 = vadd.f32 %v33, %v123
    %v125 = vpop.f32.mrf.mxu0
    %126 = vmatprep.mubr.f32.mxu0 0.0
    %127 = vmatmul.mubr.f32.gmra.mxu0 %v40
    %v128 = vpop.f32.mrf.mxu0
    %v129 = vadd.f32 %v33, %v128
    %v130 = vpop.f32.mrf.mxu0
    %131 = vmatprep.mubr.f32.mxu0 0.0
    %132 = vmatmul.mubr.f32.gmra.mxu0 %v43
    %v133 = vpop.f32.mrf.mxu0
    %v134 = vadd.f32 %v33, %v133
    %v135 = vpop.f32.mrf.mxu0
    %136 = vmatprep.mubr.f32.mxu0 0.0
    %137 = vmatmul.mubr.f32.gmra.mxu0 %v46
    %v138 = vpop.f32.mrf.mxu0
    %v139 = vadd.f32 %v33, %v138
    %v140 = vpop.f32.mrf.mxu0
    %141 = vmatprep.mubr.f32.mxu0 0.0
    %142 = vmatmul.mubr.f32.gmra.mxu0 %v49
    %v143 = vpop.f32.mrf.mxu0
    %v144 = vadd.f32 %v33, %v143
    %v145 = vpop.f32.mrf.mxu0
    %146 = vmatprep.mubr.f32.mxu0 0.0
    %147 = vmatmul.mubr.f32.gmra.mxu0 %v52
    %v148 = vpop.f32.mrf.mxu0
    %v149 = vadd.f32 %v33, %v148
    %v150 = vpop.f32.mrf.mxu0
    %151 = vmatprep.mubr.f32.mxu0 0.0
    %152 = vmatmul.mubr.f32.gmra.mxu0 %v55
    %v153 = vpop.f32.mrf.mxu0
    %v154 = vadd.f32 %v33, %v153
    %v155 = vpop.f32.mrf.mxu0
    %156 = vdwg.mxu0
    %157 = vst [vmem:[#allocation2] sm:$0xff] %v124
    %158 = vst [vmem:[#allocation2 + $0x8] sm:$0xff] %v129
    %159 = vst [vmem:[#allocation2 + $0x10] sm:$0xff] %v134
    %160 = vst [vmem:[#allocation2 + $0x18] sm:$0xff] %v139
    %161 = vst [vmem:[#allocation2 + $0x20] sm:$0xff] %v144
    %162 = vst [vmem:[#allocation2 + $0x28] sm:$0xff] %v149
    %163 = vst [vmem:[#allocation2 + $0x30] sm:$0xff] %v154
    // Predicated region
    $region14: #{tpu_custom_call.1} parent=1 // pred_check
      _
    $region15: #{tpu_custom_call.1} parent=1 // pred_check_branch
      %165 = sbr.rel (0) target = $region17
    $region16: #{tpu_custom_call.1} parent=1 // pred_region
      %s167 = ssub.s32 896, 896
      %168 = vsyncadd [#allocation3], %s167
      %s169 = sshll.u32 [#allocation2], 4
      %s170 = int_to_ptr.vmem [resolvable:$true] %s169
      %175 = dma.vmem_to_hbm [thread:$0]  %s170, 896, %s3, [#allocation3], 128, 128, 8
    $region17: #{tpu_custom_call.1} parent=1 // pred_fallthru
      _
    // Predicated region
    $region18: #{tpu_custom_call.1} parent=1 // pred_check
      _
    $region19: #{tpu_custom_call.1} parent=1 // pred_check_branch
      %177 = sbr.rel (0) target = $region21
    $region20: #{tpu_custom_call.1} parent=1 // pred_region
      %178 = dma.done [#allocation3], 896
    $region21: #{tpu_custom_call.1} parent=1 // pred_fallthru
      _
    %179 = vsyncpa [#allocation3], 1

</llo_original>
